<compile_context>
chip_gen: v6e
topology: v6e:2x2x1
jax: 0.10.0
libtpu: 0.0.40
codegen_flags: <defaults>
</compile_context>

<pallas_src>
import functools
import math

import jax
import jax.numpy as jnp
import numpy as np
from jax.experimental import pallas as pl
from jax.experimental.pallas import tpu as pltpu


def _dilated_conv_row_kernel(x_ref, w_ref, b_ref, o_ref, xpad_ref, *,
                             kernel_size, dilation, padding, seq_len, out_len):
    """Grid = (B,); one batch row per step.

    x_ref   : (1, C_in, L)            input row (auto-pipelined HBM->VMEM)
    w_ref   : (K, C_out, C_in)        per-tap weights (constant index map)
    b_ref   : (C_out, 1)              f32 bias column
    o_ref   : (1, C_out, L_out)       output row
    xpad_ref: (C_in, L + 2*padding)   VMEM scratch = zero-padded input row
    """
    c_in = xpad_ref.shape[0]
    pad_total = xpad_ref.shape[1]
    left = padding
    right = pad_total - padding - seq_len

    # Zero only the pad columns.  Done unconditionally every step (scratch
    # persists across grid steps and a megacore shard may start at b != 0,
    # so no pl.when(b == 0) init), but it is only `2*padding` columns of VMEM.
    if left > 0:
        xpad_ref[:, :left] = jnp.zeros((c_in, left), xpad_ref.dtype)
    if right > 0:
        xpad_ref[:, left + seq_len:] = jnp.zeros((c_in, right), xpad_ref.dtype)
    xpad_ref[:, left:left + seq_len] = x_ref[0].astype(xpad_ref.dtype)

    # K accumulating MXU dots over statically shifted views of the padded row
    # (no im2col materialization, no concatenate).  f32 accumulation on-chip.
    acc = jnp.dot(w_ref[0], xpad_ref[:, 0:out_len],
                  preferred_element_type=jnp.float32)
    for k in range(1, kernel_size):
        s = k * dilation
        acc += jnp.dot(w_ref[k], xpad_ref[:, s:s + out_len],
                       preferred_element_type=jnp.float32)

    o_ref[0] = (acc + b_ref[...]).astype(o_ref.dtype)


def dynamic_dilation_conv(x, weight, bias, log_dilation, *, compute_dtype=None):
    """Reproduces DynamicDilationConv.forward(x)."""
    B, C_in, L = x.shape
    C_out, _, K = weight.shape

    # dilation = int(clamp(exp(log_dilation), min=1.0).round().item())
    # NOTE: this is a concrete host read (exactly like .item() in PyTorch), so
    # this wrapper cannot itself be traced by jax.jit over log_dilation, and
    # each distinct dilation value specializes/recompiles the kernel.
    dilation = int(round(max(math.exp(float(log_dilation[0])), 1.0)))
    padding = (K - 1) * dilation // 2
    halo = dilation * (K - 1)
    L_out = L + 2 * padding - halo
    assert L_out >= 1, "sequence too short for this kernel size / dilation"

    cdt = jnp.dtype(compute_dtype) if compute_dtype is not None else x.dtype
    P = L + 2 * padding  # padded row width held in VMEM scratch

    # Per-tap weight layout: w3[k, o, i] = weight[o, i, k].
    w3 = jnp.transpose(weight, (2, 0, 1)).astype(cdt)
    bias_col = bias.astype(jnp.float32).reshape(C_out, 1)

    kernel = functools.partial(
        _dilated_conv_row_kernel,
        kernel_size=K, dilation=dilation, padding=padding,
        seq_len=L, out_len=L_out)

    # VMEM budget: double-buffered x row + out row, scratch row, f32 acc,
    # weights/bias.  Clamp the hint below ~48 MiB so it is safe on v7x (64 MiB
    # physical) as well as v5e/v6e.
    x_sz = jnp.dtype(x.dtype).itemsize
    c_sz = jnp.dtype(cdt).itemsize
    vmem_needed = (2 * C_in * L * x_sz          # x row, double-buffered
                   + C_in * P * c_sz            # padded scratch row
                   + 2 * C_out * L_out * x_sz   # out row, double-buffered
                   + C_out * L_out * 4          # f32 accumulator
                   + 2 * K * C_out * C_in * c_sz + C_out * 4)
    vmem_limit = int(min(max(2 * vmem_needed, 8 * 1024 * 1024),
                         48 * 1024 * 1024))

    flops = 2 * B * C_out * C_in * K * L_out
    bytes_accessed = int(x.size * x_sz + w3.size * c_sz + bias_col.size * 4
                         + B * C_out * L_out * x_sz)

    # TODO(synk): for very long rows (C*L of many MiB) add an L-tiled variant
    # (grid over L blocks with a double-buffered haloed-window DMA) instead of
    # keeping the whole row resident in VMEM; also lets megacore split when B==1.
    out = pl.pallas_call(
        kernel,
        out_shape=jax.ShapeDtypeStruct((B, C_out, L_out), x.dtype),
        grid_spec=pltpu.PrefetchScalarGridSpec(
            num_scalar_prefetch=0,
            grid=(B,),
            in_specs=[
                pl.BlockSpec((1, C_in, L), lambda b: (b, 0, 0)),      # x row
                pl.BlockSpec((K, C_out, C_in), lambda b: (0, 0, 0)),  # weights
                pl.BlockSpec((C_out, 1), lambda b: (0, 0)),           # bias
            ],
            out_specs=pl.BlockSpec((1, C_out, L_out), lambda b: (b, 0, 0)),
            scratch_shapes=[pltpu.VMEM((C_in, P), cdt)],
        ),
        compiler_params=pltpu.CompilerParams(
            dimension_semantics=("parallel",),
            vmem_limit_bytes=vmem_limit,
        ),
        cost_estimate=pl.CostEstimate(
            flops=flops, transcendentals=0, bytes_accessed=bytes_accessed),
    )(x, w3, bias_col)
    return out


def _reference_conv1d(x, weight, bias, dilation, padding):
    """Pure-JAX reference matching F.conv1d semantics."""
    return jax.lax.conv_general_dilated(
        x, weight,
        window_strides=(1,),
        padding=[(padding, padding)],
        rhs_dilation=(dilation,),
        dimension_numbers=("NCH", "OIH", "NCH"),
    ) + bias.reshape(1, -1, 1)


if __name__ == "__main__":
    # Small shapes consistent with the module: batch=2, in_channels=4,
    # out_channels=8, kernel_size=3, sequence length=16.
    B, C_in, C_out, K, L = 2, 4, 8, 3, 16

    key = jax.random.PRNGKey(0)
    kx, kw, kb = jax.random.split(key, 3)

    x = jax.random.normal(kx, (B, C_in, L), dtype=jnp.float32)

    # Deterministic Conv1d-like uniform init.
    bound = 1.0 / math.sqrt(C_in * K)
    weight = jax.random.uniform(kw, (C_out, C_in, K), jnp.float32, -bound, bound)
    bias = jax.random.uniform(kb, (C_out,), jnp.float32, -bound, bound)

    # Case 1: log_dilation = 0  ->  dilation = 1 (the module's init state).
    log_dilation = jnp.zeros((1,), dtype=jnp.float32)
    out = jax.block_until_ready(
        dynamic_dilation_conv(x, weight, bias, log_dilation))
    dil = int(round(max(math.exp(float(log_dilation[0])), 1.0)))
    pad = (K - 1) * dil // 2
    ref = jax.block_until_ready(_reference_conv1d(x, weight, bias, dil, pad))
    assert out.shape == ref.shape, (out.shape, ref.shape)
    assert np.allclose(np.asarray(out), np.asarray(ref), rtol=1e-5, atol=1e-5)

    # Case 2: a trained log_dilation giving dilation = 2 (exercises dilation).
    log_dilation2 = jnp.full((1,), math.log(2.0), dtype=jnp.float32)
    out2 = jax.block_until_ready(
        dynamic_dilation_conv(x, weight, bias, log_dilation2))
    dil2 = int(round(max(math.exp(float(log_dilation2[0])), 1.0)))
    pad2 = (K - 1) * dil2 // 2
    ref2 = jax.block_until_ready(_reference_conv1d(x, weight, bias, dil2, pad2))
    assert out2.shape == ref2.shape, (out2.shape, ref2.shape)
    assert np.allclose(np.asarray(out2), np.asarray(ref2), rtol=1e-5, atol=1e-5)

    print("KERNEL_OK")
</pallas_src>

<mosaic_0001>
module attributes {stable_mosaic.version = 11 : i64} {
  func.func @_dilated_conv_row_kernel(%arg0: i32, %arg1: memref<1x4x16xf32, #tpu.memory_space<vmem>>, %arg2: memref<3x8x4xf32, #tpu.memory_space<vmem>>, %arg3: memref<8x1xf32, #tpu.memory_space<vmem>>, %arg4: memref<1x8x16xf32, #tpu.memory_space<vmem>>, %arg5: memref<4x18xf32, #tpu.memory_space<vmem>>) attributes {dimension_semantics = [#tpu.dimension_semantics<parallel>], iteration_bounds = array<i64: 2>, scalar_prefetch = 0 : i64, scratch_operands = 1 : i64, tpu.core_type = #tpu.core_type<tc>, window_params = [{transform_indices = @transform_0, window_bounds = array<i64: 1, 4, 16>}, {pipeline_mode = #tpu.pipeline_mode<synchronous>, transform_indices = @transform_1, window_bounds = array<i64: 3, 8, 4>}, {pipeline_mode = #tpu.pipeline_mode<synchronous>, transform_indices = @transform_2, window_bounds = array<i64: 8, 1>}, {transform_indices = @transform_3, window_bounds = array<i64: 1, 8, 16>}]} {
    %cst = arith.constant 0.000000e+00 : f32
    %0 = vector.broadcast %cst : f32 to vector<4x1xf32>
    %c0 = arith.constant 0 : index
    %c0_0 = arith.constant 0 : index
    %1 = vector.load %arg5[%c0, %c0_0] : memref<4x18xf32, #tpu.memory_space<vmem>>, vector<4x1xf32>
    tpu.vector_store %arg5[%c0, %c0_0], %0 {strides = array<i32>} : memref<4x18xf32, #tpu.memory_space<vmem>>, vector<4x1xf32>,
    %cst_1 = arith.constant 0.000000e+00 : f32
    %2 = vector.broadcast %cst_1 : f32 to vector<4x1xf32>
    %c0_2 = arith.constant 0 : index
    %c17 = arith.constant 17 : index
    %3 = vector.load %arg5[%c0_2, %c17] : memref<4x18xf32, #tpu.memory_space<vmem>>, vector<4x1xf32>
    tpu.vector_store %arg5[%c0_2, %c17], %2 {strides = array<i32>} : memref<4x18xf32, #tpu.memory_space<vmem>>, vector<4x1xf32>,
    %c0_3 = arith.constant 0 : index
    %c0_4 = arith.constant 0 : index
    %c0_5 = arith.constant 0 : index
    %4 = vector.load %arg1[%c0_3, %c0_4, %c0_5] : memref<1x4x16xf32, #tpu.memory_space<vmem>>, vector<1x4x16xf32>
    %5 = vector.shape_cast %4 : vector<1x4x16xf32> to vector<4x16xf32>
    %c0_6 = arith.constant 0 : index
    %c1 = arith.constant 1 : index
    %6 = vector.load %arg5[%c0_6, %c1] : memref<4x18xf32, #tpu.memory_space<vmem>>, vector<4x16xf32>
    tpu.vector_store %arg5[%c0_6, %c1], %5 {strides = array<i32>} : memref<4x18xf32, #tpu.memory_space<vmem>>, vector<4x16xf32>,
    %c0_7 = arith.constant 0 : index
    %c0_8 = arith.constant 0 : index
    %c0_9 = arith.constant 0 : index
    %7 = vector.load %arg2[%c0_7, %c0_8, %c0_9] : memref<3x8x4xf32, #tpu.memory_space<vmem>>, vector<1x8x4xf32>
    %8 = vector.shape_cast %7 : vector<1x8x4xf32> to vector<8x4xf32>
    %c0_10 = arith.constant 0 : index
    %c0_11 = arith.constant 0 : index
    %9 = vector.load %arg5[%c0_10, %c0_11] : memref<4x18xf32, #tpu.memory_space<vmem>>, vector<4x16xf32>
    %cst_12 = arith.constant dense<0.000000e+00> : vector<8x16xf32>
    %10 = tpu.matmul %8, %9, %cst_12 {dimension_numbers = #tpu.dot_dimension_numbers<[1], [0], [0], [1], [0, 0, 1, 1], [], []>} : vector<8x4xf32>, vector<4x16xf32>, vector<8x16xf32> -> vector<8x16xf32>
    %c1_13 = arith.constant 1 : index
    %c0_14 = arith.constant 0 : index
    %c0_15 = arith.constant 0 : index
    %11 = vector.load %arg2[%c1_13, %c0_14, %c0_15] : memref<3x8x4xf32, #tpu.memory_space<vmem>>, vector<1x8x4xf32>
    %12 = vector.shape_cast %11 : vector<1x8x4xf32> to vector<8x4xf32>
    %c0_16 = arith.constant 0 : index
    %c1_17 = arith.constant 1 : index
    %13 = vector.load %arg5[%c0_16, %c1_17] : memref<4x18xf32, #tpu.memory_space<vmem>>, vector<4x16xf32>
    %cst_18 = arith.constant dense<0.000000e+00> : vector<8x16xf32>
    %14 = tpu.matmul %12, %13, %cst_18 {dimension_numbers = #tpu.dot_dimension_numbers<[1], [0], [0], [1], [0, 0, 1, 1], [], []>} : vector<8x4xf32>, vector<4x16xf32>, vector<8x16xf32> -> vector<8x16xf32>
    %15 = arith.addf %10, %14 : vector<8x16xf32>
    %c2 = arith.constant 2 : index
    %c0_19 = arith.constant 0 : index
    %c0_20 = arith.constant 0 : index
    %16 = vector.load %arg2[%c2, %c0_19, %c0_20] : memref<3x8x4xf32, #tpu.memory_space<vmem>>, vector<1x8x4xf32>
    %17 = vector.shape_cast %16 : vector<1x8x4xf32> to vector<8x4xf32>
    %c0_21 = arith.constant 0 : index
    %c2_22 = arith.constant 2 : index
    %18 = vector.load %arg5[%c0_21, %c2_22] : memref<4x18xf32, #tpu.memory_space<vmem>>, vector<4x16xf32>
    %cst_23 = arith.constant dense<0.000000e+00> : vector<8x16xf32>
    %19 = tpu.matmul %17, %18, %cst_23 {dimension_numbers = #tpu.dot_dimension_numbers<[1], [0], [0], [1], [0, 0, 1, 1], [], []>} : vector<8x4xf32>, vector<4x16xf32>, vector<8x16xf32> -> vector<8x16xf32>
    %20 = arith.addf %15, %19 : vector<8x16xf32>
    %c0_24 = arith.constant 0 : index
    %c0_25 = arith.constant 0 : index
    %21 = vector.load %arg3[%c0_24, %c0_25] : memref<8x1xf32, #tpu.memory_space<vmem>>, vector<8x1xf32>
    %22 = vector.broadcast %21 : vector<8x1xf32> to vector<8x16xf32>
    %23 = arith.addf %20, %22 : vector<8x16xf32>
    %c0_26 = arith.constant 0 : index
    %c0_27 = arith.constant 0 : index
    %c0_28 = arith.constant 0 : index
    %24 = vector.load %arg4[%c0_26, %c0_27, %c0_28] : memref<1x8x16xf32, #tpu.memory_space<vmem>>, vector<1x8x16xf32>
    %25 = vector.shape_cast %24 : vector<1x8x16xf32> to vector<8x16xf32>
    %26 = vector.shape_cast %23 : vector<8x16xf32> to vector<1x8x16xf32>
    tpu.vector_store %arg4[%c0_26, %c0_27, %c0_28], %26 {strides = array<i32>} : memref<1x8x16xf32, #tpu.memory_space<vmem>>, vector<1x8x16xf32>,
    return
  }
  func.func @transform_0(%arg0: i32) -> (i32, i32, i32) {
    %c0_i32 = arith.constant 0 : i32
    %c0_i32_0 = arith.constant 0 : i32
    %c0_i32_1 = arith.constant 0 : i32
    return %arg0, %c0_i32, %c0_i32_0 : i32, i32, i32
  }
  func.func @transform_1(%arg0: i32) -> (i32, i32, i32) {
    %c0_i32 = arith.constant 0 : i32
    %c0_i32_0 = arith.constant 0 : i32
    %c0_i32_1 = arith.constant 0 : i32
    %c0_i32_2 = arith.constant 0 : i32
    return %c0_i32, %c0_i32_0, %c0_i32_1 : i32, i32, i32
  }
  func.func @transform_2(%arg0: i32) -> (i32, i32) {
    %c0_i32 = arith.constant 0 : i32
    %c0_i32_0 = arith.constant 0 : i32
    %c0_i32_1 = arith.constant 0 : i32
    return %c0_i32, %c0_i32_0 : i32, i32
  }
  func.func @transform_3(%arg0: i32) -> (i32, i32, i32) {
    %c0_i32 = arith.constant 0 : i32
    %c0_i32_0 = arith.constant 0 : i32
    %c0_i32_1 = arith.constant 0 : i32
    return %arg0, %c0_i32, %c0_i32_0 : i32, i32, i32
  }
}

</mosaic_0001>

<llo_original>
// kernel: tpu_custom_call.1
$region0: #{tpu_custom_call.1}
  #allocation0 [shape = 'u32[]', space=smem, size = 0x4, offset = 0x4, fixed_abs, tag = 'smem constant byte address 0x4 - core index']
  #allocation1 [shape = 'u32[144,128]{1,0:T(1,128)}', space=vmem, size = 0x12000, scoped, tag = 'internal scratch']
  #allocation2 [shape = 'f32[4,18]{1,0:T(4,128)}', space=vmem, size = 0x800, scoped, tag = 'scratch operand']
  %s0 = inlined_call_operand.vmem [shape: f32[2,4,16], index: 0, kind: input, shape index: {}]
  %s1 = inlined_call_operand.vmem [shape: f32[3,8,4], index: 1, kind: input, shape index: {}]
  %s2 = inlined_call_operand.vmem [shape: f32[8,1], index: 2, kind: input, shape index: {}]
  %s3 = inlined_call_operand.hbm [shape: f32[2,8,16], index: 3, kind: output, shape index: {}]
  %s4 = sld [smem:[#allocation0]]
  $region45: #{tpu_custom_call.1} parent=0
    _
  %s6 = ssub.s32 1, %s4
  %s7 = scalar_select 0, %s6, %s4
  $region1: #{tpu_custom_call.1} parent=0
    #allocation3 [shape = 'u8[8192]{0}', space=vmem, size = 0x2000, scoped, tag = 'output window, operand 0']
    #allocation4 [shape = 's32[2]{0}', space=sflag, size = 0x8, scoped, tag = 'scoped memory for tpu_custom_call.1']
    %8 = vsyncpa [#allocation4], 0
    %s9 = scalar_lea.sflag [#allocation4], 1
    %10 = vsyncpa %s9, 0
    loop: start=0, step=1, limit=4
    $region2: #{tpu_custom_call.1} parent=1 // loop_pre_header
      _
    $region3: #{tpu_custom_call.1} parent=1 // loop_header
      %s12 = sphi 0, %s16
      %p13 = scmp.ge.s32.totalorder %s12, 4
      %s22 = sphi 0, %s24
      %s25 = sphi 0, %s22
      %s26 = sphi 0, %s25
      %s42 = sphi 0, %s26
      %s46 = sphi 0, %s46
      %s48 = sphi 0, %s46
      %s49 = sphi 0, %s48
      %s63 = sphi 0, %s49
      %s67 = sphi 0, %s67
      %s69 = sphi 0, %s67
      %s70 = sphi 0, %s69
      %s84 = sphi 0, %s70
      %s90 = sphi 0, %s92
      %s93 = sphi 0, %s90
      %s94 = sphi 0, %s93
      %s110 = sphi 0, %s94
    $region4: #{tpu_custom_call.1} parent=1 // loop_header_branch
      %15 = sbr.rel (%p13) target = $region8
    $region5: #{tpu_custom_call.1} parent=1 // loop_body
      %s17 = ssub.s32 %s12, 1
      %s18 = ssub.s32 %s12, 2
      %s19 = sadd.s32 %s12, 1
      %s20 = ssub.s32 %s12, %s19
      %p21 = scmp.eq.s32.totalorder %s20, 0
      %s23 = sadd.s32 %s22, 1
      %s24 = scalar_select %p21, %s22, %s23
      %p27 = pneg %p21
      %p28 = scmp.eq.s32.totalorder %s12, 1
      %p29 = por %p27, %p28
      %p30 = scmp.ne.s32.totalorder %s22, %s25
      %p31 = scmp.eq.s32.totalorder %s12, 0
      %p32 = por %p30, %p31
      %p33 = scmp.ne.s32.totalorder %s22, %s25
      %p34 = scmp.eq.s32.totalorder %s17, 1
      %p35 = por %p33, %p34
      %p36 = scmp.ne.s32.totalorder %s25, %s26
      %p37 = scmp.eq.s32.totalorder %s17, 0
      %p38 = por %p36, %p37
      %p39 = scmp.ne.s32.totalorder %s25, %s26
      %p40 = scmp.eq.s32.totalorder %s18, 1
      %p41 = por %p39, %p40
      %p43 = scmp.ne.s32.totalorder %s26, %s42
      %p44 = scmp.eq.s32.totalorder %s18, 0
      %p45 = por %p43, %p44
      %s47 = sadd.s32 %s46, 1
      %p50 = scmp.eq.s32.totalorder %s12, 1
      %p51 = scmp.ne.s32.totalorder %s46, %s48
      %p52 = scmp.eq.s32.totalorder %s12, 0
      %p53 = por %p51, %p52
      %p54 = scmp.ne.s32.totalorder %s46, %s48
      %p55 = scmp.eq.s32.totalorder %s17, 1
      %p56 = por %p54, %p55
      %p57 = scmp.ne.s32.totalorder %s48, %s49
      %p58 = scmp.eq.s32.totalorder %s17, 0
      %p59 = por %p57, %p58
      %p60 = scmp.ne.s32.totalorder %s48, %s49
      %p61 = scmp.eq.s32.totalorder %s18, 1
      %p62 = por %p60, %p61
      %p64 = scmp.ne.s32.totalorder %s49, %s63
      %p65 = scmp.eq.s32.totalorder %s18, 0
      %p66 = por %p64, %p65
      %s68 = sadd.s32 %s67, 1
      %p71 = scmp.eq.s32.totalorder %s12, 1
      %p72 = scmp.ne.s32.totalorder %s67, %s69
      %p73 = scmp.eq.s32.totalorder %s12, 0
      %p74 = por %p72, %p73
      %p75 = scmp.ne.s32.totalorder %s67, %s69
      %p76 = scmp.eq.s32.totalorder %s17, 1
      %p77 = por %p75, %p76
      %p78 = scmp.ne.s32.totalorder %s69, %s70
      %p79 = scmp.eq.s32.totalorder %s17, 0
      %p80 = por %p78, %p79
      %p81 = scmp.ne.s32.totalorder %s69, %s70
      %p82 = scmp.eq.s32.totalorder %s18, 1
      %p83 = por %p81, %p82
      %p85 = scmp.ne.s32.totalorder %s70, %s84
      %p86 = scmp.eq.s32.totalorder %s18, 0
      %p87 = por %p85, %p86
      %s88 = ssub.s32 %s12, %s19
      %p89 = scmp.eq.s32.totalorder %s88, 0
      %s91 = sadd.s32 %s90, 1
      %s92 = scalar_select %p89, %s90, %s91
      %p95 = pneg %p89
      %p96 = scmp.eq.s32.totalorder %s12, 1
      %p97 = por %p95, %p96
      %p98 = scmp.ne.s32.totalorder %s90, %s93
      %p99 = scmp.eq.s32.totalorder %s12, 0
      %p100 = por %p98, %p99
      %p101 = scmp.ne.s32.totalorder %s90, %s93
      %p102 = scmp.eq.s32.totalorder %s17, 1
      %p103 = por %p101, %p102
      %p104 = scmp.ne.s32.totalorder %s93, %s94
      %p105 = scmp.eq.s32.totalorder %s17, 0
      %p106 = por %p104, %p105
      %p107 = scmp.ne.s32.totalorder %s93, %s94
      %p108 = scmp.eq.s32.totalorder %s18, 1
      %p109 = por %p107, %p108
      %p111 = scmp.ne.s32.totalorder %s94, %s110
      %p112 = scmp.eq.s32.totalorder %s18, 0
      %p113 = por %p111, %p112
      %p114 = scmp.le.s32.totalorder 1, %s12
      %p115 = scmp.lt.s32.totalorder %s12, 3
      %p116 = pnand %p114, %p115
      %p117 = pneg %p116
      // Predicated region
      $region9: #{tpu_custom_call.1} parent=5 // pred_check
        _
      $region10: #{tpu_custom_call.1} parent=5 // pred_check_branch
        %119 = sbr.rel (%p116) target = $region12
      $region11: #{tpu_custom_call.1} parent=5 // pred_region
        %s120 = ssub.s32 %s12, 1
        // Predicated region
        $region13: #{tpu_custom_call.1} parent=11 // pred_check
          %p121 = pneg %p59
        $region14: #{tpu_custom_call.1} parent=11 // pred_check_branch
          %123 = sbr.rel (%p121) target = $region16
        $region15: #{tpu_custom_call.1} parent=11 // pred_region
          _
        $region16: #{tpu_custom_call.1} parent=11 // pred_fallthru
          _
        // Predicated region
        $region17: #{tpu_custom_call.1} parent=11 // pred_check
          %p124 = pneg %p80
        $region18: #{tpu_custom_call.1} parent=11 // pred_check_branch
          %126 = sbr.rel (%p124) target = $region20
        $region19: #{tpu_custom_call.1} parent=11 // pred_region
          _
        $region20: #{tpu_custom_call.1} parent=11 // pred_fallthru
          _
      $region12: #{tpu_custom_call.1} parent=5 // pred_fallthru
        _
      %p127 = scmp.lt.s32.totalorder %s12, 2
      // Predicated region
      $region21: #{tpu_custom_call.1} parent=5 // pred_check
        %p128 = pneg %p127
      $region22: #{tpu_custom_call.1} parent=5 // pred_check_branch
        %130 = sbr.rel (%p128) target = $region24
      $region23: #{tpu_custom_call.1} parent=5 // pred_region
        // Predicated region
        $region25: #{tpu_custom_call.1} parent=23 // pred_check
          %p131 = pneg %p32
        $region26: #{tpu_custom_call.1} parent=23 // pred_check_branch
          %133 = sbr.rel (%p131) target = $region28
        $region27: #{tpu_custom_call.1} parent=23 // pred_region
          %p134 = scmp.lt.s32.totalorder %s12, 1
          %s135 = scalar_select %p134, %s12, 1
          %s136 = smul.addr %s135, 4
          %s137 = scalar_lea.vmem %s0, %s136
        $region28: #{tpu_custom_call.1} parent=23 // pred_fallthru
          _
      $region24: #{tpu_custom_call.1} parent=5 // pred_fallthru
        _
      %p138 = scmp.le.s32.totalorder 1, %s12
      %p139 = scmp.lt.s32.totalorder %s12, 3
      %p140 = pnand %p138, %p139
      %p141 = pneg %p140
      // Predicated region
      $region29: #{tpu_custom_call.1} parent=5 // pred_check
        _
      $region30: #{tpu_custom_call.1} parent=5 // pred_check_branch
        %143 = sbr.rel (%p140) target = $region32
      $region31: #{tpu_custom_call.1} parent=5 // pred_region
        %s144 = ssub.s32 %s12, 1
        %p145 = scmp.lt.s32.totalorder %s17, 1
        %s146 = scalar_select %p145, %s17, 1
        %s147 = smul.addr %s146, 4
        %s148 = scalar_lea.vmem %s0, %s147
        %p149 = pneg %p38
        %p150 = pneg %p35
        %p151 = pneg %p59
        %p152 = pneg %p56
        %p153 = pneg %p80
        %p154 = pneg %p77
        %p155 = pneg %p106
        %p156 = pneg %p103
        %s157 = sand.u32 %s93, 1
        %s158 = scalar_lea.sflag [#allocation4], %s157
        %s159 = sand.u32 %s93, 1
        %s160 = smul.addr %s159, 8
        %s161 = scalar_lea.vmem [#allocation3], %s160
        %p162 = scmp.lt.s32.totalorder %s17, 1
        %s163 = scalar_select %p162, %s17, 1
        %s164 = smul.addr %s163, 4
        %s165 = scalar_lea.vmem %s0, %s164
        %vm166 = vcmask 3072
        %167 = vst.msk [vmem:[#allocation2] sm:$0xf] %vm166, 0.0
        %vm168 = vcmask 142472
        %169 = vst.msk [vmem:[#allocation2] sm:$0xf] %vm168, 0.0
        %v170 = vld [vmem:[%s165] sm:$0xf]
        %172 = vrot.lane.b32.xlu0 %v170, 1
        %v173 = vpop.permute.xlu0 %172
        %vm175 = vcmask 134152
        %176 = vst.msk [vmem:[#allocation2] sm:$0xf] %vm175, %v173
        %v177 = vld [vmem:[%s1] sm:$0xff]
        %v178 = vld [vmem:[#allocation2] sm:$0xf]
        %s179 = scalar_lea.vmem %s1, 8
        %v180 = vld [vmem:[%s179] sm:$0xff]
        %182 = vrot.lane.b32.xlu0 %v178, 127
        %v183 = vpop.permute.xlu0 %182
        %vm184 = vcmask 31744
        %v186 = vsel %vm184, %v180, 0
        %vm188 = vcmask 1043456
        %v189 = vsel %vm188, %v183, 0
        %191 = vmatprep.subr.mxu0 0.0
        %192 = vmatpush1.msra.mxu0 0.0
        %193 = vmatprep.subr.mxu0 0.0
        %194 = vmatpush1.msra.mxu0 0.0
        %195 = vmatprep.subr.mxu0 0.0
        %196 = vmatpush1.msra.mxu0 0.0
        %197 = vmatprep.subr.mxu0 0.0
        %198 = vmatpush1.msra.mxu0 0.0
        %199 = vmatprep.subr.mxu0 0.0
        %200 = vmatpush1.msra.mxu0 0.0
        %201 = vmatprep.subr.mxu0 0.0
        %202 = vmatpush1.msra.mxu0 0.0
        %203 = vmatprep.subr.mxu0 0.0
        %204 = vmatpush1.msra.mxu0 0.0
        %205 = vmatprep.subr.mxu0 0.0
        %206 = vmatpush1.msra.mxu0 0.0
        %207 = vmatprep.subr.mxu0 0.0
        %208 = vmatpush1.msra.mxu0 0.0
        %209 = vmatprep.subr.mxu0 0.0
        %210 = vmatpush1.msra.mxu0 0.0
        %211 = vmatprep.subr.mxu0 0.0
        %212 = vmatpush1.msra.mxu0 0.0
        %213 = vmatprep.subr.mxu0 0.0
        %214 = vmatpush1.msra.mxu0 0.0
        %215 = vmatprep.subr.mxu0 0.0
        %216 = vmatpush1.msra.mxu0 0.0
        %217 = vmatprep.subr.mxu0 0.0
        %218 = vmatpush1.msra.mxu0 0.0
        %219 = vmatprep.subr.mxu0 0.0
        %220 = vmatpush1.msra.mxu0 0.0
        %221 = vmatprep.subr.mxu0 0.0
        %222 = vmatpush1.msra.mxu0 %v189
        %223 = vmatprep.subr.mxu0 0.0
        %224 = vmatpush2.msra.mxu0 0.0
        %225 = vmatprep.subr.mxu0 0.0
        %226 = vmatpush2.msra.mxu0 0.0
        %227 = vmatprep.subr.mxu0 0.0
        %228 = vmatpush2.msra.mxu0 0.0
        %229 = vmatprep.subr.mxu0 0.0
        %230 = vmatpush2.msra.mxu0 0.0
        %231 = vmatprep.subr.mxu0 0.0
        %232 = vmatpush2.msra.mxu0 0.0
        %233 = vmatprep.subr.mxu0 0.0
        %234 = vmatpush2.msra.mxu0 0.0
        %235 = vmatprep.subr.mxu0 0.0
        %236 = vmatpush2.msra.mxu0 0.0
        %237 = vmatprep.subr.mxu0 0.0
        %238 = vmatpush2.msra.mxu0 0.0
        %239 = vmatprep.subr.mxu0 0.0
        %240 = vmatpush2.msra.mxu0 0.0
        %241 = vmatprep.subr.mxu0 0.0
        %242 = vmatpush2.msra.mxu0 0.0
        %243 = vmatprep.subr.mxu0 0.0
        %244 = vmatpush2.msra.mxu0 0.0
        %245 = vmatprep.subr.mxu0 0.0
        %246 = vmatpush2.msra.mxu0 0.0
        %247 = vmatprep.subr.mxu0 0.0
        %248 = vmatpush2.msra.mxu0 0.0
        %249 = vmatprep.subr.mxu0 0.0
        %250 = vmatpush2.msra.mxu0 0.0
        %251 = vmatprep.subr.mxu0 0.0
        %252 = vmatpush2.msra.mxu0 0.0
        %253 = vmatprep.subr.mxu0 0.0
        %254 = vmatpush2.msra.mxu0 0.0
        %255 = vmatprep.mubr.f32.mxu0 0.0
        %256 = vmatmul.mubr.f32.gmra.mxu0 %v186
        %v257 = vpop.f32.mrf.mxu0
        %v258 = vadd.f32 0.0, %v257
        %v259 = vpop.f32.mrf.mxu0
        %260 = vdwg.mxu0
        %v262 = vsel %vm184, %v177, 0
        %v264 = vsel %vm188, %v178, 0
        %266 = vmatprep.subr.mxu0 0.0
        %267 = vmatpush1.msra.mxu0 0.0
        %268 = vmatprep.subr.mxu0 0.0
        %269 = vmatpush1.msra.mxu0 0.0
        %270 = vmatprep.subr.mxu0 0.0
        %271 = vmatpush1.msra.mxu0 0.0
        %272 = vmatprep.subr.mxu0 0.0
        %273 = vmatpush1.msra.mxu0 0.0
        %274 = vmatprep.subr.mxu0 0.0
        %275 = vmatpush1.msra.mxu0 0.0
        %276 = vmatprep.subr.mxu0 0.0
        %277 = vmatpush1.msra.mxu0 0.0
        %278 = vmatprep.subr.mxu0 0.0
        %279 = vmatpush1.msra.mxu0 0.0
        %280 = vmatprep.subr.mxu0 0.0
        %281 = vmatpush1.msra.mxu0 0.0
        %282 = vmatprep.subr.mxu0 0.0
        %283 = vmatpush1.msra.mxu0 0.0
        %284 = vmatprep.subr.mxu0 0.0
        %285 = vmatpush1.msra.mxu0 0.0
        %286 = vmatprep.subr.mxu0 0.0
        %287 = vmatpush1.msra.mxu0 0.0
        %288 = vmatprep.subr.mxu0 0.0
        %289 = vmatpush1.msra.mxu0 0.0
        %290 = vmatprep.subr.mxu0 0.0
        %291 = vmatpush1.msra.mxu0 0.0
        %292 = vmatprep.subr.mxu0 0.0
        %293 = vmatpush1.msra.mxu0 0.0
        %294 = vmatprep.subr.mxu0 0.0
        %295 = vmatpush1.msra.mxu0 0.0
        %296 = vmatprep.subr.mxu0 0.0
        %297 = vmatpush1.msra.mxu0 %v264
        %298 = vmatprep.subr.mxu0 0.0
        %299 = vmatpush2.msra.mxu0 0.0
        %300 = vmatprep.subr.mxu0 0.0
        %301 = vmatpush2.msra.mxu0 0.0
        %302 = vmatprep.subr.mxu0 0.0
        %303 = vmatpush2.msra.mxu0 0.0
        %304 = vmatprep.subr.mxu0 0.0
        %305 = vmatpush2.msra.mxu0 0.0
        %306 = vmatprep.subr.mxu0 0.0
        %307 = vmatpush2.msra.mxu0 0.0
        %308 = vmatprep.subr.mxu0 0.0
        %309 = vmatpush2.msra.mxu0 0.0
        %310 = vmatprep.subr.mxu0 0.0
        %311 = vmatpush2.msra.mxu0 0.0
        %312 = vmatprep.subr.mxu0 0.0
        %313 = vmatpush2.msra.mxu0 0.0
        %314 = vmatprep.subr.mxu0 0.0
        %315 = vmatpush2.msra.mxu0 0.0
        %316 = vmatprep.subr.mxu0 0.0
        %317 = vmatpush2.msra.mxu0 0.0
        %318 = vmatprep.subr.mxu0 0.0
        %319 = vmatpush2.msra.mxu0 0.0
        %320 = vmatprep.subr.mxu0 0.0
        %321 = vmatpush2.msra.mxu0 0.0
        %322 = vmatprep.subr.mxu0 0.0
        %323 = vmatpush2.msra.mxu0 0.0
        %324 = vmatprep.subr.mxu0 0.0
        %325 = vmatpush2.msra.mxu0 0.0
        %326 = vmatprep.subr.mxu0 0.0
        %327 = vmatpush2.msra.mxu0 0.0
        %328 = vmatprep.subr.mxu0 0.0
        %329 = vmatpush2.msra.mxu0 0.0
        %330 = vmatprep.mubr.f32.mxu0 0.0
        %331 = vmatmul.mubr.f32.gmra.mxu0 %v262
        %v332 = vpop.f32.mrf.mxu0
        %v333 = vadd.f32 %v258, %v332
        %v334 = vpop.f32.mrf.mxu0
        %335 = vdwg.mxu0
        %s336 = scalar_lea.vmem %s1, 16
        %v337 = vld [vmem:[%s336] sm:$0xff]
        %338 = vrot.lane.b32.xlu0 %v178, 126
        %v339 = vpop.permute.xlu0 %338
        %v341 = vsel %vm184, %v337, 0
        %v343 = vsel %vm188, %v339, 0
        %345 = vmatprep.subr.mxu0 0.0
        %346 = vmatpush1.msra.mxu0 0.0
        %347 = vmatprep.subr.mxu0 0.0
        %348 = vmatpush1.msra.mxu0 0.0
        %349 = vmatprep.subr.mxu0 0.0
        %350 = vmatpush1.msra.mxu0 0.0
        %351 = vmatprep.subr.mxu0 0.0
        %352 = vmatpush1.msra.mxu0 0.0
        %353 = vmatprep.subr.mxu0 0.0
        %354 = vmatpush1.msra.mxu0 0.0
        %355 = vmatprep.subr.mxu0 0.0
        %356 = vmatpush1.msra.mxu0 0.0
        %357 = vmatprep.subr.mxu0 0.0
        %358 = vmatpush1.msra.mxu0 0.0
        %359 = vmatprep.subr.mxu0 0.0
        %360 = vmatpush1.msra.mxu0 0.0
        %361 = vmatprep.subr.mxu0 0.0
        %362 = vmatpush1.msra.mxu0 0.0
        %363 = vmatprep.subr.mxu0 0.0
        %364 = vmatpush1.msra.mxu0 0.0
        %365 = vmatprep.subr.mxu0 0.0
        %366 = vmatpush1.msra.mxu0 0.0
        %367 = vmatprep.subr.mxu0 0.0
        %368 = vmatpush1.msra.mxu0 0.0
        %369 = vmatprep.subr.mxu0 0.0
        %370 = vmatpush1.msra.mxu0 0.0
        %371 = vmatprep.subr.mxu0 0.0
        %372 = vmatpush1.msra.mxu0 0.0
        %373 = vmatprep.subr.mxu0 0.0
        %374 = vmatpush1.msra.mxu0 0.0
        %375 = vmatprep.subr.mxu0 0.0
        %376 = vmatpush1.msra.mxu0 %v343
        %377 = vmatprep.subr.mxu0 0.0
        %378 = vmatpush2.msra.mxu0 0.0
        %379 = vmatprep.subr.mxu0 0.0
        %380 = vmatpush2.msra.mxu0 0.0
        %381 = vmatprep.subr.mxu0 0.0
        %382 = vmatpush2.msra.mxu0 0.0
        %383 = vmatprep.subr.mxu0 0.0
        %384 = vmatpush2.msra.mxu0 0.0
        %385 = vmatprep.subr.mxu0 0.0
        %386 = vmatpush2.msra.mxu0 0.0
        %387 = vmatprep.subr.mxu0 0.0
        %388 = vmatpush2.msra.mxu0 0.0
        %389 = vmatprep.subr.mxu0 0.0
        %390 = vmatpush2.msra.mxu0 0.0
        %391 = vmatprep.subr.mxu0 0.0
        %392 = vmatpush2.msra.mxu0 0.0
        %393 = vmatprep.subr.mxu0 0.0
        %394 = vmatpush2.msra.mxu0 0.0
        %395 = vmatprep.subr.mxu0 0.0
        %396 = vmatpush2.msra.mxu0 0.0
        %397 = vmatprep.subr.mxu0 0.0
        %398 = vmatpush2.msra.mxu0 0.0
        %399 = vmatprep.subr.mxu0 0.0
        %400 = vmatpush2.msra.mxu0 0.0
        %401 = vmatprep.subr.mxu0 0.0
        %402 = vmatpush2.msra.mxu0 0.0
        %403 = vmatprep.subr.mxu0 0.0
        %404 = vmatpush2.msra.mxu0 0.0
        %405 = vmatprep.subr.mxu0 0.0
        %406 = vmatpush2.msra.mxu0 0.0
        %407 = vmatprep.subr.mxu0 0.0
        %408 = vmatpush2.msra.mxu0 0.0
        %409 = vmatprep.mubr.f32.mxu0 0.0
        %410 = vmatmul.mubr.f32.gmra.mxu0 %v341
        %v411 = vpop.f32.mrf.mxu0
        %v412 = vadd.f32 0.0, %v411
        %v413 = vpop.f32.mrf.mxu0
        %414 = vdwg.mxu0
        %v415 = vadd.f32 %v333, %v412
        %v416 = vld [vmem:[%s2] sm:$0xff]
        %418 = vset.pattern.permute.xlu0 0
        %419 = vperm.xlu0 %418, %v416
        %v420 = vpop.permute.xlu0 %419
        %v422 = vadd.f32 %v415, %v420
        %vm423 = vcmask 130048
        %424 = vst.msk [vmem:[%s161] sm:$0xff] %vm423, %v422
        %s425 = sand.u32 %s93, 1
        %s426 = scalar_lea.sflag [#allocation4], %s425
        %s427 = sand.u32 %s93, 1
        %s428 = smul.addr %s427, 8
        %s429 = scalar_lea.vmem [#allocation3], %s428
        // Predicated region
        $region33: #{tpu_custom_call.1} parent=31 // pred_check
          %p430 = pneg %p103
        $region34: #{tpu_custom_call.1} parent=31 // pred_check_branch
          %432 = sbr.rel (%p430) target = $region36
        $region35: #{tpu_custom_call.1} parent=31 // pred_region
          %s434 = ssub.s32 128, 128
          %435 = vsyncadd %s426, %s434
          %s436 = smul.addr %s17, 128
          %s437 = scalar_lea.hbm %s3, %s436
          %s439 = sshll.u32 %s429, 4
          %s440 = int_to_ptr.vmem [resolvable:$true] %s439
          %442 = dma.vmem_to_hbm [thread:$0]  %s440, 128, %s437, %s426
        $region36: #{tpu_custom_call.1} parent=31 // pred_fallthru
          _
      $region32: #{tpu_custom_call.1} parent=5 // pred_fallthru
        _
      %p443 = scmp.le.s32.totalorder 2, %s12
      // Predicated region
      $region37: #{tpu_custom_call.1} parent=5 // pred_check
        %p444 = pneg %p443
      $region38: #{tpu_custom_call.1} parent=5 // pred_check_branch
        %446 = sbr.rel (%p444) target = $region40
      $region39: #{tpu_custom_call.1} parent=5 // pred_region
        %s447 = ssub.s32 %s12, 2
        // Predicated region
        $region41: #{tpu_custom_call.1} parent=39 // pred_check
          %p448 = pneg %p109
        $region42: #{tpu_custom_call.1} parent=39 // pred_check_branch
          %450 = sbr.rel (%p448) target = $region44
        $region43: #{tpu_custom_call.1} parent=39 // pred_region
          %s451 = sand.u32 %s94, 1
          %s452 = scalar_lea.sflag [#allocation4], %s451
          %s453 = sand.u32 %s94, 1
          %s454 = smul.addr %s453, 8
          %s455 = scalar_lea.vmem [#allocation3], %s454
          %456 = dma.done %s452, 128
        $region44: #{tpu_custom_call.1} parent=39 // pred_fallthru
          _
      $region40: #{tpu_custom_call.1} parent=5 // pred_fallthru
        _
    $region6: #{tpu_custom_call.1} parent=1 // loop_footer
      %s16 = sadd.s32 1, %s12
    $region7: #{tpu_custom_call.1} parent=1 // loop_footer_branch
      %11 = sbr.rel target = $region3
    $region8: #{tpu_custom_call.1} parent=1 // loop_exit
      _
    %457 = vsyncpa [#allocation4], 1
    %s458 = scalar_lea.sflag [#allocation4], 1
    %459 = vsyncpa %s458, 1

</llo_original>
